<compile_context>
chip_gen: v6e
topology: v6e:2x2x1
jax: 0.10.0
libtpu: 0.0.40
codegen_flags: <defaults>
</compile_context>

<pallas_src>
import functools

import jax
import jax.numpy as jnp
from jax import lax
from jax.experimental import pallas as pl
from jax.experimental.pallas import tpu as pltpu


def _round_up(x: int, m: int) -> int:
    return ((x + m - 1) // m) * m


def _softmax_xent_kernel(n_rows, n_classes, tm, tc, needs_class_mask,
                         x_ref, w_ref, b_ref, lab_ref, out_ref,
                         m_sc, l_sc, corr_sc):
    # x_ref   : (TM, nOut)  f32/bf16 -- resident across class tiles
    # w_ref   : (TC, nOut)  f32/bf16 -- streamed per class tile (no pre-transpose)
    # b_ref   : (1, TC)     f32
    # lab_ref : (TM, 1)     i32
    # out_ref : (1, 128)    f32      -- lane-dense per-batch-tile partial loss
    # m_sc/l_sc/corr_sc : (TM, 1) f32 online-logsumexp accumulators
    i = pl.program_id(0)          # batch tile (parallel)
    j = pl.program_id(1)          # class tile (reduction axis, innermost)

    @pl.when(j == 0)
    def _init():
        m_sc[...] = jnp.full_like(m_sc, -jnp.inf)
        l_sc[...] = jnp.zeros_like(l_sc)
        corr_sc[...] = jnp.zeros_like(corr_sc)

    # logits = x @ W^T + b : contract the nOut axis of both operands on the MXU.
    logits = lax.dot_general(
        x_ref[...], w_ref[...],
        dimension_numbers=(((1,), (1,)), ((), ())),
        preferred_element_type=jnp.float32) + b_ref[...]           # (TM, TC) f32

    col = lax.broadcasted_iota(jnp.int32, (tm, tc), 1)             # grid-invariant
    if needs_class_mask:
        # Tail class tile: columns beyond nClasses (padding / ragged block
        # garbage) must not contribute to the softmax.
        logits = jnp.where(col < (n_classes - j * tc), logits, -1e30)

    # online logsumexp update
    m_prev = m_sc[...]
    m_new = jnp.maximum(m_prev, jnp.max(logits, axis=-1, keepdims=True))
    alpha = jnp.exp(m_prev - m_new)
    l_sc[...] = alpha * l_sc[...] + jnp.sum(jnp.exp(logits - m_new),
                                            axis=-1, keepdims=True)
    m_sc[...] = m_new

    # accumulate target-class logit (each label hits exactly one class tile;
    # labels < nClasses so they never land in the masked tail columns)
    target = lab_ref[...] - j * tc                                  # (TM, 1)
    corr_sc[...] += jnp.sum(jnp.where(col == target, logits, 0.0),
                            axis=-1, keepdims=True)

    @pl.when(j == pl.num_programs(1) - 1)
    def _finalize():
        lse = m_sc[...] + jnp.log(l_sc[...])                        # (TM, 1)
        per_row = lse - corr_sc[...]
        # mask out batch-padding rows so the mean uses the true N
        row = i * tm + lax.broadcasted_iota(jnp.int32, (tm, 1), 0)
        valid = (row < n_rows).astype(jnp.float32)
        partial = jnp.sum(per_row * valid)
        out_ref[...] = jnp.broadcast_to(partial, (1, 128))


def _vmem_budget():
    """(vmem_limit_bytes, tile_budget_bytes) sized per TPU generation."""
    cap = 128 * 1024 * 1024
    try:
        cap = int(pltpu.get_tpu_info().vmem_capacity_bytes)
    except Exception:
        pass
    vmem_limit = min((cap * 3) // 4, 96 * 1024 * 1024)   # 96 MiB v5e/v6e, 48 MiB v7x
    tile_budget = (vmem_limit * 3) // 4                   # headroom for compiler temps
    return vmem_limit, tile_budget


def _vmem_tile_bytes(tm, tc, n_out, op_esize):
    x_buf = 2 * tm * n_out * op_esize        # double-buffered x tile
    w_buf = 2 * tc * n_out * op_esize        # double-buffered weight tile
    b_buf = 2 * tc * 4
    lab_buf = 2 * tm * 128 * 4               # (tm,1) i32, lane-padded
    scratch = 3 * tm * 128 * 4               # (tm,1) f32 accumulators, lane-padded
    temps = 3 * tm * tc * 4                  # logits / exp / where temporaries
    out_buf = 2 * 128 * 4
    return x_buf + w_buf + b_buf + lab_buf + scratch + temps + out_buf


def _choose_tiles(n, c_pad, n_out, op_esize, budget):
    """Largest (TM, TC) that fits the VMEM budget; TM prioritized (it sets how
    often the whole weight matrix is re-streamed from HBM)."""
    sub = 16 if op_esize == 2 else 8
    n_sub = _round_up(max(n, 1), sub)
    tm_cands, seen = [], set()
    for t in (512, 256, 128, 64, 32, 16, 8):
        if t % sub:
            continue
        te = min(t, n_sub)
        if te not in seen:
            seen.add(te)
            tm_cands.append(te)
    tc_cands, seen = [], set()
    for t in (1024, 512, 256, 128):
        te = min(t, c_pad)
        if te not in seen:
            seen.add(te)
            tc_cands.append(te)
    for tm in tm_cands:
        for tc in tc_cands:
            if _vmem_tile_bytes(tm, tc, n_out, op_esize) <= budget:
                return tm, tc
    return tm_cands[-1], tc_cands[-1]


def softmax_loss(x, weight, bias, label, *, matmul_dtype=None):
    """x: (N, nOut), weight: (nClasses, nOut), bias: (nClasses,), label: (N,) int.
    Returns scalar mean cross-entropy of (x @ W^T + b) vs label, in f32.
    matmul_dtype=jnp.bfloat16 runs MXU operands in bf16 (f32 accumulation and
    f32 softmax) for v6e/v7x throughput when the accuracy budget allows."""
    n, n_out = x.shape
    n_classes = weight.shape[0]

    op_dtype = jnp.float32 if matmul_dtype is None else matmul_dtype
    op_esize = jnp.dtype(op_dtype).itemsize

    vmem_limit, tile_budget = _vmem_budget()

    # Class dim padded only to a lane multiple of 128 when unaligned (no-op for
    # 128-aligned vocabularies -> no full-weight HBM copy); ragged tail class
    # tiles are masked in-kernel.
    c_pad = _round_up(n_classes, 128)
    tm, tc = _choose_tiles(n, c_pad, n_out, op_esize, tile_budget)
    n_pad = _round_up(n, tm)
    nbt = n_pad // tm
    nct = pl.cdiv(c_pad, tc)
    needs_class_mask = (nct * tc != n_classes)

    # wrapper-side dtype cast (bf16 path halves HBM traffic and VMEM tiles)
    x = x.astype(op_dtype)
    weight = weight.astype(op_dtype)
    if n_pad != n:
        x = jnp.pad(x, ((0, n_pad - n), (0, 0)))
        label = jnp.pad(label, (0, n_pad - n))
    if c_pad != n_classes:
        weight = jnp.pad(weight, ((0, c_pad - n_classes), (0, 0)))
    bias2 = jnp.pad(bias.astype(jnp.float32),
                    (0, nct * tc - n_classes)).reshape(1, nct * tc)
    lab2 = label.astype(jnp.int32).reshape(n_pad, 1)

    kernel = functools.partial(_softmax_xent_kernel, n, n_classes, tm, tc,
                               needs_class_mask)

    partials = pl.pallas_call(
        kernel,
        out_shape=jax.ShapeDtypeStruct((1, 128 * nbt), jnp.float32),
        grid_spec=pltpu.PrefetchScalarGridSpec(
            num_scalar_prefetch=0,
            grid=(nbt, nct),
            in_specs=[
                pl.BlockSpec((tm, n_out), lambda i, j: (i, 0)),   # x (resident over j)
                pl.BlockSpec((tc, n_out), lambda i, j: (j, 0)),   # weight (streamed)
                pl.BlockSpec((1, tc), lambda i, j: (0, j)),       # bias
                pl.BlockSpec((tm, 1), lambda i, j: (i, 0)),       # labels
            ],
            out_specs=pl.BlockSpec((1, 128), lambda i, j: (0, i)),
            scratch_shapes=[pltpu.VMEM((tm, 1), jnp.float32)] * 3,
        ),
        compiler_params=pltpu.CompilerParams(
            dimension_semantics=("parallel", "arbitrary"),
            vmem_limit_bytes=int(vmem_limit)),
    )(x, weight, bias2, lab2)

    # lane 0 of each batch tile's slab carries its partial sum; mean over true N.
    return partials.reshape(nbt, 128)[:, 0].sum() / n

    # TODO(synk): on v7x, when N fits a single batch tile, halving TM to get
    # nbt >= 2 would let the "parallel" axis shard across both TensorCores.


def _reference_loss(x, weight, bias, label):
    logits = x @ weight.T + bias
    lse = jax.scipy.special.logsumexp(logits, axis=-1)
    return jnp.mean(lse - logits[jnp.arange(x.shape[0]), label])


if __name__ == "__main__":
    key = jax.random.PRNGKey(0)

    # --- test 1: toy shape matching the module (batch=8, nOut=32, nClasses=10)
    N, N_OUT, N_CLASSES = 8, 32, 10
    kx, kw, kb, kl = jax.random.split(key, 4)
    bound = 1.0 / jnp.sqrt(jnp.float32(N_OUT))
    x = jax.random.normal(kx, (N, N_OUT), dtype=jnp.float32)
    weight = jax.random.uniform(kw, (N_CLASSES, N_OUT), jnp.float32, -bound, bound)
    bias = jax.random.uniform(kb, (N_CLASSES,), jnp.float32, -bound, bound)
    label = jax.random.randint(kl, (N,), 0, N_CLASSES, dtype=jnp.int32)

    loss = softmax_loss(x, weight, bias, label)
    jax.block_until_ready(loss)
    ref = _reference_loss(x, weight, bias, label)
    assert jnp.allclose(loss, ref, atol=1e-4, rtol=1e-4), (loss, ref)

    # --- test 2: multiple batch tiles + multiple (ragged) class tiles, f32
    N2, N_OUT2, N_CLASSES2 = 600, 64, 1100
    k2 = jax.random.PRNGKey(1)
    kx, kw, kb, kl = jax.random.split(k2, 4)
    bound2 = 1.0 / jnp.sqrt(jnp.float32(N_OUT2))
    x2 = jax.random.normal(kx, (N2, N_OUT2), dtype=jnp.float32)
    weight2 = jax.random.uniform(kw, (N_CLASSES2, N_OUT2), jnp.float32, -bound2, bound2)
    bias2 = jax.random.uniform(kb, (N_CLASSES2,), jnp.float32, -bound2, bound2)
    label2 = jax.random.randint(kl, (N2,), 0, N_CLASSES2, dtype=jnp.int32)

    loss2 = softmax_loss(x2, weight2, bias2, label2)
    jax.block_until_ready(loss2)
    ref2 = _reference_loss(x2, weight2, bias2, label2)
    assert jnp.allclose(loss2, ref2, atol=1e-4, rtol=1e-4), (loss2, ref2)

    # --- test 3: bf16 operand path (wrapper-side cast), looser tolerance
    loss3 = softmax_loss(x2, weight2, bias2, label2, matmul_dtype=jnp.bfloat16)
    jax.block_until_ready(loss3)
    assert jnp.allclose(loss3, ref2, atol=5e-2, rtol=5e-2), (loss3, ref2)

    print("KERNEL_OK")
</pallas_src>

<mosaic_0001>
module attributes {stable_mosaic.version = 11 : i64} {
  func.func @_softmax_xent_kernel(%arg0: i32, %arg1: i32, %arg2: memref<8x32xf32, #tpu.memory_space<vmem>>, %arg3: memref<128x32xf32, #tpu.memory_space<vmem>>, %arg4: memref<1x128xf32, #tpu.memory_space<vmem>>, %arg5: memref<8x1xi32, #tpu.memory_space<vmem>>, %arg6: memref<1x128xf32, #tpu.memory_space<vmem>>, %arg7: memref<8x1xf32, #tpu.memory_space<vmem>>, %arg8: memref<8x1xf32, #tpu.memory_space<vmem>>, %arg9: memref<8x1xf32, #tpu.memory_space<vmem>>) attributes {dimension_semantics = [#tpu.dimension_semantics<parallel>, #tpu.dimension_semantics<arbitrary>], iteration_bounds = array<i64: 1, 1>, scalar_prefetch = 0 : i64, scratch_operands = 3 : i64, tpu.core_type = #tpu.core_type<tc>, window_params = [{transform_indices = @transform_0, window_bounds = array<i64: 8, 32>}, {transform_indices = @transform_1, window_bounds = array<i64: 128, 32>}, {transform_indices = @transform_2, window_bounds = array<i64: 1, 128>}, {transform_indices = @transform_3, window_bounds = array<i64: 8, 1>}, {transform_indices = @transform_4, window_bounds = array<i64: 1, 128>}]} {
    %c0_i32 = arith.constant 0 : i32
    %0 = arith.cmpi eq, %arg1, %c0_i32 : i32
    %1 = arith.extui %0 : i1 to i32
    %c0_i32_0 = arith.constant 0 : i32
    %2 = arith.cmpi ne, %1, %c0_i32_0 : i32
    scf.if %2 {
      %cst_28 = arith.constant 0xFF800000 : f32
      %48 = vector.broadcast %cst_28 : f32 to vector<8x1xf32>
      %c0_29 = arith.constant 0 : index
      %c0_30 = arith.constant 0 : index
      %49 = vector.load %arg7[%c0_29, %c0_30] : memref<8x1xf32, #tpu.memory_space<vmem>>, vector<8x1xf32>
      tpu.vector_store %arg7[%c0_29, %c0_30], %48 {strides = array<i32>} : memref<8x1xf32, #tpu.memory_space<vmem>>, vector<8x1xf32>,
      %cst_31 = arith.constant 0.000000e+00 : f32
      %50 = vector.broadcast %cst_31 : f32 to vector<8x1xf32>
      %c0_32 = arith.constant 0 : index
      %c0_33 = arith.constant 0 : index
      %51 = vector.load %arg8[%c0_32, %c0_33] : memref<8x1xf32, #tpu.memory_space<vmem>>, vector<8x1xf32>
      tpu.vector_store %arg8[%c0_32, %c0_33], %50 {strides = array<i32>} : memref<8x1xf32, #tpu.memory_space<vmem>>, vector<8x1xf32>,
      %cst_34 = arith.constant 0.000000e+00 : f32
      %52 = vector.broadcast %cst_34 : f32 to vector<8x1xf32>
      %c0_35 = arith.constant 0 : index
      %c0_36 = arith.constant 0 : index
      %53 = vector.load %arg9[%c0_35, %c0_36] : memref<8x1xf32, #tpu.memory_space<vmem>>, vector<8x1xf32>
      tpu.vector_store %arg9[%c0_35, %c0_36], %52 {strides = array<i32>} : memref<8x1xf32, #tpu.memory_space<vmem>>, vector<8x1xf32>,
    } else {
    }
    %c0 = arith.constant 0 : index
    %c0_1 = arith.constant 0 : index
    %3 = vector.load %arg2[%c0, %c0_1] : memref<8x32xf32, #tpu.memory_space<vmem>>, vector<8x32xf32>
    %c0_2 = arith.constant 0 : index
    %c0_3 = arith.constant 0 : index
    %4 = vector.load %arg3[%c0_2, %c0_3] : memref<128x32xf32, #tpu.memory_space<vmem>>, vector<128x32xf32>
    %cst = arith.constant dense<0.000000e+00> : vector<8x128xf32>
    %5 = tpu.matmul %3, %4, %cst {dimension_numbers = #tpu.dot_dimension_numbers<[1], [1], [0], [0], [0, 0, 1, 0], [], []>} : vector<8x32xf32>, vector<128x32xf32>, vector<8x128xf32> -> vector<8x128xf32>
    %c0_4 = arith.constant 0 : index
    %c0_5 = arith.constant 0 : index
    %6 = vector.load %arg4[%c0_4, %c0_5] : memref<1x128xf32, #tpu.memory_space<vmem>>, vector<1x128xf32>
    %7 = vector.broadcast %6 : vector<1x128xf32> to vector<8x128xf32>
    %8 = arith.addf %5, %7 : vector<8x128xf32>
    %9 = tpu.iota {dimensions = array<i32: 1>} : vector<8x128xi32>
    %c128_i32 = arith.constant 128 : i32
    %10 = arith.muli %arg1, %c128_i32 : i32
    %c10_i32 = arith.constant 10 : i32
    %11 = arith.subi %c10_i32, %10 : i32
    %12 = vector.broadcast %11 : i32 to vector<8x128xi32>
    %13 = arith.cmpi slt, %9, %12 : vector<8x128xi32>
    %cst_6 = arith.constant -1.000000e+30 : f32
    %14 = vector.broadcast %cst_6 : f32 to vector<8x128xf32>
    %15 = arith.select %13, %8, %14 : vector<8x128xi1>, vector<8x128xf32>
    %c0_7 = arith.constant 0 : index
    %c0_8 = arith.constant 0 : index
    %16 = vector.load %arg7[%c0_7, %c0_8] : memref<8x1xf32, #tpu.memory_space<vmem>>, vector<8x1xf32>
    %cst_9 = arith.constant dense<0xFF800000> : vector<8xf32>
    %17 = vector.multi_reduction <maximumf>, %15, %cst_9 [1] : vector<8x128xf32> to vector<8xf32>
    %18 = vector.shape_cast %17 : vector<8xf32> to vector<8x1xf32>
    %19 = arith.maximumf %16, %18 : vector<8x1xf32>
    %20 = arith.subf %16, %19 : vector<8x1xf32>
    %21 = math.exp %20 : vector<8x1xf32>
    %c0_10 = arith.constant 0 : index
    %c0_11 = arith.constant 0 : index
    %22 = vector.load %arg8[%c0_10, %c0_11] : memref<8x1xf32, #tpu.memory_space<vmem>>, vector<8x1xf32>
    %23 = arith.mulf %21, %22 : vector<8x1xf32>
    %24 = vector.broadcast %19 : vector<8x1xf32> to vector<8x128xf32>
    %25 = arith.subf %15, %24 : vector<8x128xf32>
    %26 = math.exp %25 : vector<8x128xf32>
    %cst_12 = arith.constant dense<0.000000e+00> : vector<8xf32>
    %27 = vector.multi_reduction <add>, %26, %cst_12 [1] : vector<8x128xf32> to vector<8xf32>
    %28 = vector.shape_cast %27 : vector<8xf32> to vector<8x1xf32>
    %29 = arith.addf %23, %28 : vector<8x1xf32>
    %c0_13 = arith.constant 0 : index
    %c0_14 = arith.constant 0 : index
    %30 = vector.load %arg8[%c0_13, %c0_14] : memref<8x1xf32, #tpu.memory_space<vmem>>, vector<8x1xf32>
    tpu.vector_store %arg8[%c0_13, %c0_14], %29 {strides = array<i32>} : memref<8x1xf32, #tpu.memory_space<vmem>>, vector<8x1xf32>,
    %c0_15 = arith.constant 0 : index
    %c0_16 = arith.constant 0 : index
    %31 = vector.load %arg7[%c0_15, %c0_16] : memref<8x1xf32, #tpu.memory_space<vmem>>, vector<8x1xf32>
    tpu.vector_store %arg7[%c0_15, %c0_16], %19 {strides = array<i32>} : memref<8x1xf32, #tpu.memory_space<vmem>>, vector<8x1xf32>,
    %c0_17 = arith.constant 0 : index
    %c0_18 = arith.constant 0 : index
    %32 = vector.load %arg5[%c0_17, %c0_18] : memref<8x1xi32, #tpu.memory_space<vmem>>, vector<8x1xi32>
    %c128_i32_19 = arith.constant 128 : i32
    %33 = arith.muli %arg1, %c128_i32_19 : i32
    %34 = vector.broadcast %33 : i32 to vector<8x1xi32>
    %35 = arith.subi %32, %34 : vector<8x1xi32>
    %c0_20 = arith.constant 0 : index
    %c0_21 = arith.constant 0 : index
    %36 = vector.load %arg9[%c0_20, %c0_21] : memref<8x1xf32, #tpu.memory_space<vmem>>, vector<8x1xf32>
    %37 = vector.broadcast %35 : vector<8x1xi32> to vector<8x128xi32>
    %38 = arith.cmpi eq, %9, %37 : vector<8x128xi32>
    %cst_22 = arith.constant 0.000000e+00 : f32
    %39 = vector.broadcast %cst_22 : f32 to vector<8x128xf32>
    %40 = arith.select %38, %15, %39 : vector<8x128xi1>, vector<8x128xf32>
    %cst_23 = arith.constant dense<0.000000e+00> : vector<8xf32>
    %41 = vector.multi_reduction <add>, %40, %cst_23 [1] : vector<8x128xf32> to vector<8xf32>
    %42 = vector.shape_cast %41 : vector<8xf32> to vector<8x1xf32>
    %43 = arith.addf %36, %42 : vector<8x1xf32>
    %c0_24 = arith.constant 0 : index
    %c0_25 = arith.constant 0 : index
    %44 = vector.load %arg9[%c0_24, %c0_25] : memref<8x1xf32, #tpu.memory_space<vmem>>, vector<8x1xf32>
    tpu.vector_store %arg9[%c0_24, %c0_25], %43 {strides = array<i32>} : memref<8x1xf32, #tpu.memory_space<vmem>>, vector<8x1xf32>,
    %c0_i32_26 = arith.constant 0 : i32
    %45 = arith.cmpi eq, %arg1, %c0_i32_26 : i32
    %46 = arith.extui %45 : i1 to i32
    %c0_i32_27 = arith.constant 0 : i32
    %47 = arith.cmpi ne, %46, %c0_i32_27 : i32
    scf.if %47 {
      %c0_28 = arith.constant 0 : index
      %c0_29 = arith.constant 0 : index
      %48 = vector.load %arg7[%c0_28, %c0_29] : memref<8x1xf32, #tpu.memory_space<vmem>>, vector<8x1xf32>
      %c0_30 = arith.constant 0 : index
      %c0_31 = arith.constant 0 : index
      %49 = vector.load %arg8[%c0_30, %c0_31] : memref<8x1xf32, #tpu.memory_space<vmem>>, vector<8x1xf32>
      %50 = math.log %49 : vector<8x1xf32>
      %51 = arith.addf %48, %50 : vector<8x1xf32>
      %c0_32 = arith.constant 0 : index
      %c0_33 = arith.constant 0 : index
      %52 = vector.load %arg9[%c0_32, %c0_33] : memref<8x1xf32, #tpu.memory_space<vmem>>, vector<8x1xf32>
      %53 = arith.subf %51, %52 : vector<8x1xf32>
      %c8_i32 = arith.constant 8 : i32
      %54 = arith.muli %arg0, %c8_i32 : i32
      %55 = tpu.iota {dimensions = array<i32: 0>} : vector<8x1xi32>
      %56 = vector.broadcast %54 : i32 to vector<8x1xi32>
      %57 = arith.addi %56, %55 : vector<8x1xi32>
      %c8_i32_34 = arith.constant 8 : i32
      %58 = vector.broadcast %c8_i32_34 : i32 to vector<8x1xi32>
      %59 = arith.cmpi slt, %57, %58 : vector<8x1xi32>
      %60 = arith.extui %59 : vector<8x1xi1> to vector<8x1xi32>
      %61 = arith.sitofp %60 : vector<8x1xi32> to vector<8x1xf32>
      %62 = arith.mulf %53, %61 : vector<8x1xf32>
      %63 = vector.shape_cast %62 : vector<8x1xf32> to vector<1x8x1xf32>
      %cst_35 = arith.constant dense<0.000000e+00> : vector<1xf32>
      %64 = vector.multi_reduction <add>, %63, %cst_35 [1, 2] : vector<1x8x1xf32> to vector<1xf32>
      %65 = vector.shape_cast %64 : vector<1xf32> to vector<1x1x1xf32>
      %66 = vector.extract %65[0, 0, 0] : f32 from vector<1x1x1xf32>
      %67 = vector.broadcast %66 : f32 to vector<1x128xf32>
      %c0_36 = arith.constant 0 : index
      %c0_37 = arith.constant 0 : index
      %68 = vector.load %arg6[%c0_36, %c0_37] : memref<1x128xf32, #tpu.memory_space<vmem>>, vector<1x128xf32>
      tpu.vector_store %arg6[%c0_36, %c0_37], %67 {strides = array<i32>} : memref<1x128xf32, #tpu.memory_space<vmem>>, vector<1x128xf32>,
    } else {
    }
    return
  }
  func.func @transform_0(%arg0: i32, %arg1: i32) -> (i32, i32) {
    %c0_i32 = arith.constant 0 : i32
    %c0_i32_0 = arith.constant 0 : i32
    return %arg0, %c0_i32 : i32, i32
  }
  func.func @transform_1(%arg0: i32, %arg1: i32) -> (i32, i32) {
    %c0_i32 = arith.constant 0 : i32
    %c0_i32_0 = arith.constant 0 : i32
    return %arg1, %c0_i32 : i32, i32
  }
  func.func @transform_2(%arg0: i32, %arg1: i32) -> (i32, i32) {
    %c0_i32 = arith.constant 0 : i32
    %c0_i32_0 = arith.constant 0 : i32
    return %c0_i32, %arg1 : i32, i32
  }
  func.func @transform_3(%arg0: i32, %arg1: i32) -> (i32, i32) {
    %c0_i32 = arith.constant 0 : i32
    %c0_i32_0 = arith.constant 0 : i32
    return %arg0, %c0_i32 : i32, i32
  }
  func.func @transform_4(%arg0: i32, %arg1: i32) -> (i32, i32) {
    %c0_i32 = arith.constant 0 : i32
    %c0_i32_0 = arith.constant 0 : i32
    return %c0_i32, %arg0 : i32, i32
  }
}

</mosaic_0001>

<llo_original>
// kernel: tpu_custom_call.1
$region0: #{tpu_custom_call.1}
  #allocation0 [shape = 'u32[]', space=smem, size = 0x4, offset = 0x4, fixed_abs, tag = 'smem constant byte address 0x4 - core index']
  #allocation1 [shape = 'u32[144,128]{1,0:T(1,128)}', space=vmem, size = 0x12000, scoped, tag = 'internal scratch']
  #allocation2 [shape = 'f32[8,1]{1,0:T(8,128)}', space=vmem, size = 0x1000, scoped, tag = 'scratch operand']
  #allocation3 [shape = 'f32[8,1]{1,0:T(8,128)}', space=vmem, size = 0x1000, scoped, tag = 'scratch operand']
  #allocation4 [shape = 'f32[8,1]{1,0:T(8,128)}', space=vmem, size = 0x1000, scoped, tag = 'scratch operand']
  %s0 = inlined_call_operand.vmem [shape: f32[8,32], index: 0, kind: input, shape index: {}]
  %s1 = inlined_call_operand.vmem [shape: f32[128,32], index: 1, kind: input, shape index: {}]
  %s2 = inlined_call_operand.vmem [shape: f32[1,128], index: 2, kind: input, shape index: {}]
  %s3 = inlined_call_operand.vmem [shape: s32[8,1], index: 3, kind: input, shape index: {}]
  %s4 = inlined_call_operand.hbm [shape: f32[1,128], index: 4, kind: output, shape index: {}]
  %s5 = sld [smem:[#allocation0]]
  $region34: #{tpu_custom_call.1} parent=0
    _
  %s7 = ssub.s32 1, %s5
  %s8 = scalar_select 0, %s7, %s5
  $region1: #{tpu_custom_call.1} parent=0
    #allocation5 [shape = 'u8[512]{0}', space=vmem, size = 0x400, scoped, tag = 'output window, operand 0, single buffered']
    #allocation6 [shape = 's32[1]{0}', space=sflag, size = 0x4, scoped, tag = 'scoped memory for tpu_custom_call.1']
    %9 = vsyncpa [#allocation6], 0
    // Predicated region
    $region2: #{tpu_custom_call.1} parent=1 // pred_check
      _
    $region3: #{tpu_custom_call.1} parent=1 // pred_check_branch
      %11 = sbr.rel (0) target = $region5
    $region4: #{tpu_custom_call.1} parent=1 // pred_region
      _
    $region5: #{tpu_custom_call.1} parent=1 // pred_fallthru
      _
    // Predicated region
    $region6: #{tpu_custom_call.1} parent=1 // pred_check
      _
    $region7: #{tpu_custom_call.1} parent=1 // pred_check_branch
      %13 = sbr.rel (0) target = $region9
    $region8: #{tpu_custom_call.1} parent=1 // pred_region
      _
    $region9: #{tpu_custom_call.1} parent=1 // pred_fallthru
      _
    // Predicated region
    $region10: #{tpu_custom_call.1} parent=1 // pred_check
      _
    $region11: #{tpu_custom_call.1} parent=1 // pred_check_branch
      %15 = sbr.rel (0) target = $region13
    $region12: #{tpu_custom_call.1} parent=1 // pred_region
      _
    $region13: #{tpu_custom_call.1} parent=1 // pred_fallthru
      _
    // Predicated region
    $region14: #{tpu_custom_call.1} parent=1 // pred_check
      _
    $region15: #{tpu_custom_call.1} parent=1 // pred_check_branch
      %17 = sbr.rel (0) target = $region17
    $region16: #{tpu_custom_call.1} parent=1 // pred_region
      _
    $region17: #{tpu_custom_call.1} parent=1 // pred_fallthru
      _
    %p18 = scmp.eq.s32.totalorder 0, 0
    // Predicated region
    $region18: #{tpu_custom_call.1} parent=1 // pred_check
      %p19 = pneg %p18
    $region19: #{tpu_custom_call.1} parent=1 // pred_check_branch
      %21 = sbr.rel (%p19) target = $region21
    $region20: #{tpu_custom_call.1} parent=1 // pred_region
      %vm22 = vcmask 7168
      %23 = vst.msk [vmem:[#allocation2] sm:$0xff] %vm22, -inf
      %24 = vst.msk [vmem:[#allocation3] sm:$0xff] %vm22, 0.0
      %25 = vst.msk [vmem:[#allocation4] sm:$0xff] %vm22, 0.0
    $region21: #{tpu_custom_call.1} parent=1 // pred_fallthru
      _
    %v26 = vld [vmem:[%s0] sm:$0xff]
    %v27 = vld [vmem:[%s1] sm:$0xff]
    %v28 = vld [vmem:[%s1 + $0x8] sm:$0xff]
    %v29 = vld [vmem:[%s1 + $0x10] sm:$0xff]
    %v30 = vld [vmem:[%s1 + $0x18] sm:$0xff]
    %v31 = vld [vmem:[%s1 + $0x20] sm:$0xff]
    %v32 = vld [vmem:[%s1 + $0x28] sm:$0xff]
    %v33 = vld [vmem:[%s1 + $0x30] sm:$0xff]
    %v34 = vld [vmem:[%s1 + $0x38] sm:$0xff]
    %v35 = vld [vmem:[%s1 + $0x40] sm:$0xff]
    %v36 = vld [vmem:[%s1 + $0x48] sm:$0xff]
    %v37 = vld [vmem:[%s1 + $0x50] sm:$0xff]
    %v38 = vld [vmem:[%s1 + $0x58] sm:$0xff]
    %v39 = vld [vmem:[%s1 + $0x60] sm:$0xff]
    %v40 = vld [vmem:[%s1 + $0x68] sm:$0xff]
    %v41 = vld [vmem:[%s1 + $0x70] sm:$0xff]
    %v42 = vld [vmem:[%s1 + $0x78] sm:$0xff]
    %v43 = vld [vmem:[%s2] sm:$0x1]
    %v45 = vlaneseq
    %v46 = vshrl.u32 %v45, 7
    %v47 = vsub.s32 0, %v46
    %v48 = vrot.slane %v43, %v47
    %vm50 = vcmask 261120
    %v52 = vsel %vm50, %v26, 0
    %v55 = vsel %vm50, %v27, 0
    %v58 = vsel %vm50, %v28, 0
    %v61 = vsel %vm50, %v29, 0
    %v64 = vsel %vm50, %v30, 0
    %v67 = vsel %vm50, %v31, 0
    %v70 = vsel %vm50, %v32, 0
    %v73 = vsel %vm50, %v33, 0
    %v76 = vsel %vm50, %v34, 0
    %v79 = vsel %vm50, %v35, 0
    %v82 = vsel %vm50, %v36, 0
    %v85 = vsel %vm50, %v37, 0
    %v88 = vsel %vm50, %v38, 0
    %v91 = vsel %vm50, %v39, 0
    %v94 = vsel %vm50, %v40, 0
    %v97 = vsel %vm50, %v41, 0
    %v100 = vsel %vm50, %v42, 0
    %102 = vmatprep.subr.mxu0 0.0
    %103 = vmatpush1.xpose.msra.mxu0 %v100
    %104 = vmatprep.subr.mxu0 0.0
    %105 = vmatpush1.xpose.msra.mxu0 %v97
    %106 = vmatprep.subr.mxu0 0.0
    %107 = vmatpush1.xpose.msra.mxu0 %v94
    %108 = vmatprep.subr.mxu0 0.0
    %109 = vmatpush1.xpose.msra.mxu0 %v91
    %110 = vmatprep.subr.mxu0 0.0
    %111 = vmatpush1.xpose.msra.mxu0 %v88
    %112 = vmatprep.subr.mxu0 0.0
    %113 = vmatpush1.xpose.msra.mxu0 %v85
    %114 = vmatprep.subr.mxu0 0.0
    %115 = vmatpush1.xpose.msra.mxu0 %v82
    %116 = vmatprep.subr.mxu0 0.0
    %117 = vmatpush1.xpose.msra.mxu0 %v79
    %118 = vmatprep.subr.mxu0 0.0
    %119 = vmatpush1.xpose.msra.mxu0 %v76
    %120 = vmatprep.subr.mxu0 0.0
    %121 = vmatpush1.xpose.msra.mxu0 %v73
    %122 = vmatprep.subr.mxu0 0.0
    %123 = vmatpush1.xpose.msra.mxu0 %v70
    %124 = vmatprep.subr.mxu0 0.0
    %125 = vmatpush1.xpose.msra.mxu0 %v67
    %126 = vmatprep.subr.mxu0 0.0
    %127 = vmatpush1.xpose.msra.mxu0 %v64
    %128 = vmatprep.subr.mxu0 0.0
    %129 = vmatpush1.xpose.msra.mxu0 %v61
    %130 = vmatprep.subr.mxu0 0.0
    %131 = vmatpush1.xpose.msra.mxu0 %v58
    %132 = vmatprep.subr.mxu0 0.0
    %133 = vmatpush1.xpose.msra.mxu0 %v55
    %134 = vmatprep.subr.mxu0 0.0
    %135 = vmatpush2.xpose.msra.mxu0 0.0
    %136 = vmatprep.subr.mxu0 0.0
    %137 = vmatpush2.xpose.msra.mxu0 0.0
    %138 = vmatprep.subr.mxu0 0.0
    %139 = vmatpush2.xpose.msra.mxu0 0.0
    %140 = vmatprep.subr.mxu0 0.0
    %141 = vmatpush2.xpose.msra.mxu0 0.0
    %142 = vmatprep.subr.mxu0 0.0
    %143 = vmatpush2.xpose.msra.mxu0 0.0
    %144 = vmatprep.subr.mxu0 0.0
    %145 = vmatpush2.xpose.msra.mxu0 0.0
    %146 = vmatprep.subr.mxu0 0.0
    %147 = vmatpush2.xpose.msra.mxu0 0.0
    %148 = vmatprep.subr.mxu0 0.0
    %149 = vmatpush2.xpose.msra.mxu0 0.0
    %150 = vmatprep.subr.mxu0 0.0
    %151 = vmatpush2.xpose.msra.mxu0 0.0
    %152 = vmatprep.subr.mxu0 0.0
    %153 = vmatpush2.xpose.msra.mxu0 0.0
    %154 = vmatprep.subr.mxu0 0.0
    %155 = vmatpush2.xpose.msra.mxu0 0.0
    %156 = vmatprep.subr.mxu0 0.0
    %157 = vmatpush2.xpose.msra.mxu0 0.0
    %158 = vmatprep.subr.mxu0 0.0
    %159 = vmatpush2.xpose.msra.mxu0 0.0
    %160 = vmatprep.subr.mxu0 0.0
    %161 = vmatpush2.xpose.msra.mxu0 0.0
    %162 = vmatprep.subr.mxu0 0.0
    %163 = vmatpush2.xpose.msra.mxu0 0.0
    %164 = vmatprep.subr.mxu0 0.0
    %165 = vmatpush2.xpose.msra.mxu0 0.0
    %166 = vmatprep.mubr.f32.mxu0 0.0
    %167 = vmatmul.mubr.f32.gmra.mxu0 %v52
    %v168 = vpop.f32.mrf.mxu0
    %v169 = vadd.f32 %v48, %v168
    %v170 = vpop.f32.mrf.mxu0
    %171 = vdwg.mxu0
    %v172 = vlaneseq
    %v173 = vand.u32 %v172, 127
    %s174 = smul.u32 0, 128
    %s175 = ssub.s32 10, %s174
    %v176 = vstv %s175
    %vm177 = vcmp.lt.s32.totalorder %v173, %v176
    %v178 = vsel %vm177, %v169, -1e+30
    %v179 = vld [vmem:[#allocation2] sm:$0xff]
    %180 = vmax.xlane.f32.xlu0 %v178
    %v181 = vpop.xlane.xlu0 %180
    %v182 = vmax.f32 %v179, %v181
    %v183 = vsub.f32 %v179, %v182
    %v184 = vmul.f32 %v183, 1.442695
    %v185 = vpow.pop %v184
    %v186 = vld [vmem:[#allocation3] sm:$0xff]
    %v187 = vmul.f32 %v185, %v186
    %189 = vset.pattern.permute.xlu0 0
    %190 = vperm.xlu0 %189, %v182
    %v191 = vpop.permute.xlu0 %190
    %v193 = vsub.f32 %v178, %v191
    %v194 = vmul.f32 %v193, 1.442695
    %v195 = vpow.pop %v194
    %196 = vadd.xlane.f32.xlu0 %v195
    %v197 = vpop.xlane.xlu0 %196
    %v198 = vadd.f32 %v187, %v197
    %vm199 = vcmask 7168
    %200 = vst.msk [vmem:[#allocation3] sm:$0xff] %vm199, %v198
    %201 = vst.msk [vmem:[#allocation2] sm:$0xff] %vm199, %v182
    %v202 = vld [vmem:[%s3] sm:$0xff]
    %v203 = vstv %s174
    %v204 = vsub.s32 %v202, %v203
    %v205 = vld [vmem:[#allocation4] sm:$0xff]
    %206 = vset.pattern.permute.xlu0 0
    %207 = vperm.xlu0 %206, %v204
    %v208 = vpop.permute.xlu0 %207
    %vm209 = vcmp.eq.s32.totalorder %v173, %v208
    %v210 = vsel %vm209, %v178, 0.0
    %211 = vadd.xlane.f32.xlu0 %v210
    %v212 = vpop.xlane.xlu0 %211
    %v213 = vadd.f32 %v205, %v212
    %214 = vst.msk [vmem:[#allocation4] sm:$0xff] %vm199, %v213
    // Predicated region
    $region22: #{tpu_custom_call.1} parent=1 // pred_check
      %p215 = pneg %p18
    $region23: #{tpu_custom_call.1} parent=1 // pred_check_branch
      %217 = sbr.rel (%p215) target = $region25
    $region24: #{tpu_custom_call.1} parent=1 // pred_region
      %v218 = vld [vmem:[#allocation2] sm:$0xff]
      %v219 = vld [vmem:[#allocation3] sm:$0xff]
      %v220 = vlog2.pop %v219
      %v221 = vmul.f32 %v220, 0.6931472
      %v222 = vadd.f32 %v218, %v221
      %v223 = vld [vmem:[#allocation4] sm:$0xff]
      %v224 = vsub.f32 %v222, %v223
      %s225 = smul.u32 0, 8
      %v226 = vlaneseq
      %v227 = vshrl.u32 %v226, 7
      %v228 = vstv %s225
      %v229 = vadd.s32 %v228, %v227
      %vm230 = vcmp.lt.s32.totalorder %v229, 8
      %v231 = vsel %vm230, 1, 0
      %v232 = vcvt.s32.f32 %v231
      %v233 = vmul.f32 %v224, %v232
      %v234 = vsel %vm199, %v233, 0.0
      %235 = vadd.xlane.f32.xlu0 %v234
      %v236 = vpop.xlane.xlu0 %235
      %v237 = vrot.slane %v236, 4
      %v238 = vadd.f32 %v236, %v237
      %v239 = vrot.slane %v238, 2
      %v240 = vadd.f32 %v238, %v239
      %v241 = vrot.slane %v240, 1
      %v242 = vadd.f32 %v240, %v241
      %s243 = vtos %v242
      %v244 = vstv %s243
      %245 = vst [vmem:[#allocation5] sm:$0x1] %v244
    $region25: #{tpu_custom_call.1} parent=1 // pred_fallthru
      _
    // Predicated region
    $region26: #{tpu_custom_call.1} parent=1 // pred_check
      _
    $region27: #{tpu_custom_call.1} parent=1 // pred_check_branch
      %247 = sbr.rel (0) target = $region29
    $region28: #{tpu_custom_call.1} parent=1 // pred_region
      %s249 = ssub.s32 16, 16
      %250 = vsyncadd [#allocation6], %s249
      %s252 = sshll.u32 [#allocation5], 4
      %s253 = int_to_ptr.vmem [resolvable:$true] %s252
      %255 = dma.vmem_to_hbm [thread:$0]  %s253, 16, %s4, [#allocation6]
    $region29: #{tpu_custom_call.1} parent=1 // pred_fallthru
      _
    // Predicated region
    $region30: #{tpu_custom_call.1} parent=1 // pred_check
      _
    $region31: #{tpu_custom_call.1} parent=1 // pred_check_branch
      %257 = sbr.rel (0) target = $region33
    $region32: #{tpu_custom_call.1} parent=1 // pred_region
      %258 = dma.done [#allocation6], 16
    $region33: #{tpu_custom_call.1} parent=1 // pred_fallthru
      _
    %259 = vsyncpa [#allocation6], 1

</llo_original>
